<compile_context>
chip_gen: v7x
topology: tpu7x:2x2x1
jax: 0.10.0
libtpu: 0.0.40
codegen_flags: <defaults>
</compile_context>

<pallas_src>
import functools

import jax
import jax.numpy as jnp
from jax.experimental import pallas as pl
from jax.experimental.pallas import tpu as pltpu


def _round_up(x, m):
    return ((x + m - 1) // m) * m


def _actor_kernel(x_ref, w1_ref, w2_ref, w3_ref, b_ref, o_ref):
    # fc1 + relu   (bf16 MXU operands, f32 accumulate, f32 elementwise)
    x = x_ref[...].astype(jnp.bfloat16)
    h = jnp.dot(x, w1_ref[...], preferred_element_type=jnp.float32)
    h = jnp.maximum(h + b_ref[0:1, :], 0.0)
    # fc2 + relu
    h = jnp.dot(h.astype(jnp.bfloat16), w2_ref[...], preferred_element_type=jnp.float32)
    h = jnp.maximum(h + b_ref[1:2, :], 0.0)
    # mu + tanh
    h = jnp.dot(h.astype(jnp.bfloat16), w3_ref[...], preferred_element_type=jnp.float32)
    o_ref[...] = jnp.tanh(h + b_ref[2:3, :]).astype(o_ref.dtype)


@functools.partial(jax.jit, static_argnames=("n_actions", "block_b"))
def actor_forward(state, w1p, w2p, w3p, b_all, *, n_actions, block_b=512):
    """Run the padded/packed actor MLP on a [B, D_in] batch of states."""
    B, D_in = state.shape
    D_in_p, P = w1p.shape  # padded input dim / padded (common) layer width

    # Batch tile: biggest of (batch rounded to sublane) and the cap.
    tm = min(_round_up(B, 8), block_b)
    B_p = _round_up(B, tm)

    # Zero-pad the state into the lane/sublane-aligned slab the kernel expects.
    x = jnp.zeros((B_p, D_in_p), state.dtype).at[:B, :D_in].set(state)

    out = pl.pallas_call(
        _actor_kernel,
        out_shape=jax.ShapeDtypeStruct((B_p, P), jnp.float32),
        grid=(B_p // tm,),
        in_specs=[
            pl.BlockSpec((tm, D_in_p), lambda i: (i, 0)),   # state tile (pipelined)
            pl.BlockSpec((D_in_p, P), lambda i: (0, 0)),    # W1 (resident)
            pl.BlockSpec((P, P), lambda i: (0, 0)),         # W2 (resident)
            pl.BlockSpec((P, P), lambda i: (0, 0)),         # W3 (resident)
            pl.BlockSpec((3, P), lambda i: (0, 0)),         # packed biases (resident)
        ],
        out_specs=pl.BlockSpec((tm, P), lambda i: (i, 0)),  # lane-dense output
        compiler_params=pltpu.CompilerParams(
            dimension_semantics=("parallel",)),             # v7x: 2-TC sharding
    )(x, w1p, w2p, w3p, b_all)

    return out[:B, :n_actions]


def init_actor_params(key, input_dim, fc1_dims, fc2_dims, n_actions):
    """Deterministic init mimicking nn.Linear's uniform(-1/sqrt(fan_in), ...).

    Weights are stored [in, out] (transpose of PyTorch's [out, in]); f32."""
    ks = jax.random.split(key, 6)

    def lin(kw, kb, fan_in, fan_out):
        bound = 1.0 / jnp.sqrt(jnp.float32(fan_in))
        w = jax.random.uniform(kw, (fan_in, fan_out), jnp.float32, -bound, bound)
        b = jax.random.uniform(kb, (1, fan_out), jnp.float32, -bound, bound)
        return w, b

    w1, b1 = lin(ks[0], ks[1], input_dim, fc1_dims)
    w2, b2 = lin(ks[2], ks[3], fc1_dims, fc2_dims)
    w3, b3 = lin(ks[4], ks[5], fc2_dims, n_actions)
    return w1, b1, w2, b2, w3, b3


def pad_actor_params(w1, b1, w2, b2, w3, b3, *, lane=128,
                     weight_dtype=jnp.bfloat16):
    """One-time (outside the hot path) padding/packing of the actor params.

    All layer output widths are zero-padded to a common lane-multiple P, the
    input dim is padded to a lane multiple, weights are cast to bf16, and the
    three biases are packed into a single (3, P) f32 buffer."""
    d_in, f1 = w1.shape
    f2 = w2.shape[1]
    na = w3.shape[1]
    P = _round_up(max(f1, f2, na), lane)
    d_in_p = _round_up(d_in, lane)

    w1p = jnp.zeros((d_in_p, P), weight_dtype).at[:d_in, :f1].set(
        w1.astype(weight_dtype))
    w2p = jnp.zeros((P, P), weight_dtype).at[:f1, :f2].set(
        w2.astype(weight_dtype))
    w3p = jnp.zeros((P, P), weight_dtype).at[:f2, :na].set(
        w3.astype(weight_dtype))

    b_all = jnp.zeros((3, P), jnp.float32)
    b_all = b_all.at[0, :f1].set(b1.reshape(-1))
    b_all = b_all.at[1, :f2].set(b2.reshape(-1))
    b_all = b_all.at[2, :na].set(b3.reshape(-1))
    return w1p, w2p, w3p, b_all


def actor_reference_bf16(state, w1, b1, w2, b2, w3, b3):
    """Pure-JAX replica of the kernel's exact numerics (bf16 MXU, f32 accum)."""
    x = state.astype(jnp.bfloat16)
    h = jnp.dot(x, w1.astype(jnp.bfloat16), preferred_element_type=jnp.float32) + b1
    h = jnp.maximum(h, 0.0)
    h = jnp.dot(h.astype(jnp.bfloat16), w2.astype(jnp.bfloat16),
                preferred_element_type=jnp.float32) + b2
    h = jnp.maximum(h, 0.0)
    h = jnp.dot(h.astype(jnp.bfloat16), w3.astype(jnp.bfloat16),
                preferred_element_type=jnp.float32) + b3
    return jnp.tanh(h)


def actor_reference_f32(state, w1, b1, w2, b2, w3, b3):
    """Pure-f32 reference of the original module math."""
    h = jnp.maximum(state @ w1 + b1, 0.0)
    h = jnp.maximum(h @ w2 + b2, 0.0)
    return jnp.tanh(h @ w3 + b3)


if __name__ == "__main__":
    # Shapes consistent with the module: input_dims=(32,), fc1=64, fc2=64, n_actions=8
    batch = 8
    input_dim = 32
    fc1_dims = 64
    fc2_dims = 64
    n_actions = 8

    key = jax.random.PRNGKey(0)
    k_state, k_params = jax.random.split(key)

    state = jax.random.normal(k_state, (batch, input_dim), dtype=jnp.float32)
    raw_params = init_actor_params(k_params, input_dim, fc1_dims, fc2_dims, n_actions)
    padded_params = pad_actor_params(*raw_params)

    out = actor_forward(state, *padded_params, n_actions=n_actions)
    out = jax.block_until_ready(out)

    ref_bf16 = actor_reference_bf16(state, *raw_params)
    ref_f32 = actor_reference_f32(state, *raw_params)

    assert out.shape == (batch, n_actions)
    # Tight check vs. the exact-numerics (bf16 weight) replica.
    assert jnp.allclose(out, ref_bf16, atol=1e-3, rtol=1e-3), "mismatch vs bf16 reference"
    # Loose check vs. the original f32 module math (bf16 storage error only).
    assert jnp.allclose(out, ref_f32, atol=3e-2, rtol=3e-2), "mismatch vs f32 reference"

    print("KERNEL_OK")
</pallas_src>

<mosaic_0001>
module attributes {stable_mosaic.version = 11 : i64} {
  func.func @_actor_kernel(%arg0: i32, %arg1: memref<8x128xf32, #tpu.memory_space<vmem>>, %arg2: memref<128x128xbf16, #tpu.memory_space<vmem>>, %arg3: memref<128x128xbf16, #tpu.memory_space<vmem>>, %arg4: memref<128x128xbf16, #tpu.memory_space<vmem>>, %arg5: memref<3x128xf32, #tpu.memory_space<vmem>>, %arg6: memref<8x128xf32, #tpu.memory_space<vmem>>) attributes {dimension_semantics = [#tpu.dimension_semantics<parallel>], iteration_bounds = array<i64: 1>, scalar_prefetch = 0 : i64, scratch_operands = 0 : i64, tpu.core_type = #tpu.core_type<tc>, window_params = [{transform_indices = @transform_0, window_bounds = array<i64: 8, 128>}, {pipeline_mode = #tpu.pipeline_mode<synchronous>, transform_indices = @transform_1, window_bounds = array<i64: 128, 128>}, {pipeline_mode = #tpu.pipeline_mode<synchronous>, transform_indices = @transform_2, window_bounds = array<i64: 128, 128>}, {pipeline_mode = #tpu.pipeline_mode<synchronous>, transform_indices = @transform_3, window_bounds = array<i64: 128, 128>}, {pipeline_mode = #tpu.pipeline_mode<synchronous>, transform_indices = @transform_4, window_bounds = array<i64: 3, 128>}, {transform_indices = @transform_5, window_bounds = array<i64: 8, 128>}]} {
    %c0 = arith.constant 0 : index
    %c0_0 = arith.constant 0 : index
    %0 = vector.load %arg1[%c0, %c0_0] : memref<8x128xf32, #tpu.memory_space<vmem>>, vector<8x128xf32>
    %1 = arith.truncf %0 : vector<8x128xf32> to vector<8x128xbf16>
    %c0_1 = arith.constant 0 : index
    %c0_2 = arith.constant 0 : index
    %2 = vector.load %arg2[%c0_1, %c0_2] : memref<128x128xbf16, #tpu.memory_space<vmem>>, vector<128x128xbf16>
    %cst = arith.constant dense<0.000000e+00> : vector<8x128xf32>
    %3 = tpu.matmul %1, %2, %cst {dimension_numbers = #tpu.dot_dimension_numbers<[1], [0], [0], [1], [0, 0, 1, 1], [], []>} : vector<8x128xbf16>, vector<128x128xbf16>, vector<8x128xf32> -> vector<8x128xf32>
    %c0_3 = arith.constant 0 : index
    %c0_4 = arith.constant 0 : index
    %4 = vector.load %arg5[%c0_3, %c0_4] : memref<3x128xf32, #tpu.memory_space<vmem>>, vector<1x128xf32>
    %5 = vector.broadcast %4 : vector<1x128xf32> to vector<8x128xf32>
    %6 = arith.addf %3, %5 : vector<8x128xf32>
    %cst_5 = arith.constant 0.000000e+00 : f32
    %7 = vector.broadcast %cst_5 : f32 to vector<8x128xf32>
    %8 = arith.maximumf %6, %7 : vector<8x128xf32>
    %9 = arith.truncf %8 : vector<8x128xf32> to vector<8x128xbf16>
    %c0_6 = arith.constant 0 : index
    %c0_7 = arith.constant 0 : index
    %10 = vector.load %arg3[%c0_6, %c0_7] : memref<128x128xbf16, #tpu.memory_space<vmem>>, vector<128x128xbf16>
    %cst_8 = arith.constant dense<0.000000e+00> : vector<8x128xf32>
    %11 = tpu.matmul %9, %10, %cst_8 {dimension_numbers = #tpu.dot_dimension_numbers<[1], [0], [0], [1], [0, 0, 1, 1], [], []>} : vector<8x128xbf16>, vector<128x128xbf16>, vector<8x128xf32> -> vector<8x128xf32>
    %c1 = arith.constant 1 : index
    %c0_9 = arith.constant 0 : index
    %12 = vector.load %arg5[%c1, %c0_9] : memref<3x128xf32, #tpu.memory_space<vmem>>, vector<1x128xf32>
    %13 = vector.broadcast %12 : vector<1x128xf32> to vector<8x128xf32>
    %14 = arith.addf %11, %13 : vector<8x128xf32>
    %cst_10 = arith.constant 0.000000e+00 : f32
    %15 = vector.broadcast %cst_10 : f32 to vector<8x128xf32>
    %16 = arith.maximumf %14, %15 : vector<8x128xf32>
    %17 = arith.truncf %16 : vector<8x128xf32> to vector<8x128xbf16>
    %c0_11 = arith.constant 0 : index
    %c0_12 = arith.constant 0 : index
    %18 = vector.load %arg4[%c0_11, %c0_12] : memref<128x128xbf16, #tpu.memory_space<vmem>>, vector<128x128xbf16>
    %cst_13 = arith.constant dense<0.000000e+00> : vector<8x128xf32>
    %19 = tpu.matmul %17, %18, %cst_13 {dimension_numbers = #tpu.dot_dimension_numbers<[1], [0], [0], [1], [0, 0, 1, 1], [], []>} : vector<8x128xbf16>, vector<128x128xbf16>, vector<8x128xf32> -> vector<8x128xf32>
    %c2 = arith.constant 2 : index
    %c0_14 = arith.constant 0 : index
    %20 = vector.load %arg5[%c2, %c0_14] : memref<3x128xf32, #tpu.memory_space<vmem>>, vector<1x128xf32>
    %21 = vector.broadcast %20 : vector<1x128xf32> to vector<8x128xf32>
    %22 = arith.addf %19, %21 : vector<8x128xf32>
    %23 = math.tanh %22 : vector<8x128xf32>
    %c0_15 = arith.constant 0 : index
    %c0_16 = arith.constant 0 : index
    %24 = vector.load %arg6[%c0_15, %c0_16] : memref<8x128xf32, #tpu.memory_space<vmem>>, vector<8x128xf32>
    tpu.vector_store %arg6[%c0_15, %c0_16], %23 {strides = array<i32>} : memref<8x128xf32, #tpu.memory_space<vmem>>, vector<8x128xf32>,
    return
  }
  func.func @transform_0(%arg0: i32) -> (i32, i32) {
    %c0_i32 = arith.constant 0 : i32
    %c0_i32_0 = arith.constant 0 : i32
    return %arg0, %c0_i32 : i32, i32
  }
  func.func @transform_1(%arg0: i32) -> (i32, i32) {
    %c0_i32 = arith.constant 0 : i32
    %c0_i32_0 = arith.constant 0 : i32
    %c0_i32_1 = arith.constant 0 : i32
    return %c0_i32, %c0_i32_0 : i32, i32
  }
  func.func @transform_2(%arg0: i32) -> (i32, i32) {
    %c0_i32 = arith.constant 0 : i32
    %c0_i32_0 = arith.constant 0 : i32
    %c0_i32_1 = arith.constant 0 : i32
    return %c0_i32, %c0_i32_0 : i32, i32
  }
  func.func @transform_3(%arg0: i32) -> (i32, i32) {
    %c0_i32 = arith.constant 0 : i32
    %c0_i32_0 = arith.constant 0 : i32
    %c0_i32_1 = arith.constant 0 : i32
    return %c0_i32, %c0_i32_0 : i32, i32
  }
  func.func @transform_4(%arg0: i32) -> (i32, i32) {
    %c0_i32 = arith.constant 0 : i32
    %c0_i32_0 = arith.constant 0 : i32
    %c0_i32_1 = arith.constant 0 : i32
    return %c0_i32, %c0_i32_0 : i32, i32
  }
  func.func @transform_5(%arg0: i32) -> (i32, i32) {
    %c0_i32 = arith.constant 0 : i32
    %c0_i32_0 = arith.constant 0 : i32
    return %arg0, %c0_i32 : i32, i32
  }
}

</mosaic_0001>

<llo_original>
// kernel: actor_forward.1
$region0: #{actor_forward.1}
  #allocation0 [shape = 'u32[]', space=smem, size = 0x4, offset = 0x4, fixed_abs, tag = 'smem constant byte address 0x4 - core index']
  #allocation1 [shape = 'u32[144,128]{1,0:T(1,128)}', space=vmem, size = 0x12000, scoped, tag = 'internal scratch']
  %s0 = inlined_call_operand.vmem [shape: f32[8,128], index: 0, kind: input, shape index: {}]
  %s1 = inlined_call_operand.hbm [shape: bf16[128,128], index: 1, kind: input, shape index: {}]
  %s2 = inlined_call_operand.hbm [shape: bf16[128,128], index: 2, kind: input, shape index: {}]
  %s3 = inlined_call_operand.hbm [shape: bf16[128,128], index: 3, kind: input, shape index: {}]
  %s4 = inlined_call_operand.vmem [shape: f32[3,128], index: 4, kind: input, shape index: {}]
  %s5 = inlined_call_operand.hbm [shape: f32[8,128], index: 5, kind: output, shape index: {}]
  %s6 = sld [smem:[#allocation0]]
  $region42: #{actor_forward.1} parent=0
    _
  %s8 = ssub.s32 1, %s6
  %s9 = scalar_select 0, %s8, %s6
  $region1: #{actor_forward.1} parent=0
    #allocation2 [shape = 'u8[32768]{0}', space=vmem, size = 0x8000, scoped, tag = 'input window, operand 1, single buffered']
    #allocation3 [shape = 's32[1]{0}', space=sflag, size = 0x4, scoped, tag = 'scoped memory for actor_forward.1']
    #allocation4 [shape = 's32[1]{0}', space=sflag, size = 0x4, scoped, tag = 'scoped memory for actor_forward.1']
    #allocation5 [shape = 'u8[32768]{0}', space=vmem, size = 0x8000, scoped, tag = 'input window, operand 2, single buffered']
    #allocation6 [shape = 's32[1]{0}', space=sflag, size = 0x4, scoped, tag = 'scoped memory for actor_forward.1']
    #allocation7 [shape = 'u8[32768]{0}', space=vmem, size = 0x8000, scoped, tag = 'input window, operand 3, single buffered']
    #allocation8 [shape = 'u8[4096]{0}', space=vmem, size = 0x1000, scoped, tag = 'output window, operand 0, single buffered']
    %10 = vsyncpa [#allocation3], 0
    %11 = vsyncpa [#allocation6], 0
    %12 = vsyncpa [#allocation4], 0
    // Predicated region
    $region2: #{actor_forward.1} parent=1 // pred_check
      _
    $region3: #{actor_forward.1} parent=1 // pred_check_branch
      %14 = sbr.rel (0) target = $region5
    $region4: #{actor_forward.1} parent=1 // pred_region
      _
    $region5: #{actor_forward.1} parent=1 // pred_fallthru
      _
    // Predicated region
    $region6: #{actor_forward.1} parent=1 // pred_check
      _
    $region7: #{actor_forward.1} parent=1 // pred_check_branch
      %16 = sbr.rel (0) target = $region9
    $region8: #{actor_forward.1} parent=1 // pred_region
      %s18 = ssub.s32 1024, 1024
      %19 = vsyncadd [#allocation3], %s18
      %s20 = sshll.u32 [#allocation2], 4
      %s21 = int_to_ptr.vmem [resolvable:$true] %s20
      %26 = dma.hbm_to_vmem [thread:$0]  %s1, 1024, %s21, [#allocation3], 64, 64, 4
    $region9: #{actor_forward.1} parent=1 // pred_fallthru
      _
    // Predicated region
    $region10: #{actor_forward.1} parent=1 // pred_check
      _
    $region11: #{actor_forward.1} parent=1 // pred_check_branch
      %28 = sbr.rel (0) target = $region13
    $region12: #{actor_forward.1} parent=1 // pred_region
      %s30 = ssub.s32 1024, 1024
      %31 = vsyncadd [#allocation6], %s30
      %s32 = sshll.u32 [#allocation5], 4
      %s33 = int_to_ptr.vmem [resolvable:$true] %s32
      %38 = dma.hbm_to_vmem [thread:$0]  %s2, 1024, %s33, [#allocation6], 64, 64, 4
    $region13: #{actor_forward.1} parent=1 // pred_fallthru
      _
    // Predicated region
    $region14: #{actor_forward.1} parent=1 // pred_check
      _
    $region15: #{actor_forward.1} parent=1 // pred_check_branch
      %40 = sbr.rel (0) target = $region17
    $region16: #{actor_forward.1} parent=1 // pred_region
      %s42 = ssub.s32 1024, 1024
      %43 = vsyncadd [#allocation6], %s42
      %s44 = sshll.u32 [#allocation7], 4
      %s45 = int_to_ptr.vmem [resolvable:$true] %s44
      %50 = dma.hbm_to_vmem [thread:$0]  %s3, 1024, %s45, [#allocation6], 64, 64, 4
    $region17: #{actor_forward.1} parent=1 // pred_fallthru
      _
    // Predicated region
    $region18: #{actor_forward.1} parent=1 // pred_check
      _
    $region19: #{actor_forward.1} parent=1 // pred_check_branch
      %52 = sbr.rel (0) target = $region21
    $region20: #{actor_forward.1} parent=1 // pred_region
      _
    $region21: #{actor_forward.1} parent=1 // pred_fallthru
      _
    // Predicated region
    $region22: #{actor_forward.1} parent=1 // pred_check
      _
    $region23: #{actor_forward.1} parent=1 // pred_check_branch
      %54 = sbr.rel (0) target = $region25
    $region24: #{actor_forward.1} parent=1 // pred_region
      %55 = dma.done [#allocation3], 1024
    $region25: #{actor_forward.1} parent=1 // pred_fallthru
      _
    // Predicated region
    $region26: #{actor_forward.1} parent=1 // pred_check
      _
    $region27: #{actor_forward.1} parent=1 // pred_check_branch
      %57 = sbr.rel (0) target = $region29
    $region28: #{actor_forward.1} parent=1 // pred_region
      %58 = dma.done [#allocation6], 1024
    $region29: #{actor_forward.1} parent=1 // pred_fallthru
      _
    // Predicated region
    $region30: #{actor_forward.1} parent=1 // pred_check
      _
    $region31: #{actor_forward.1} parent=1 // pred_check_branch
      %60 = sbr.rel (0) target = $region33
    $region32: #{actor_forward.1} parent=1 // pred_region
      %61 = dma.done [#allocation6], 1024
    $region33: #{actor_forward.1} parent=1 // pred_fallthru
      _
    %v63 = vld [vmem:[%s0] sm:$0xff]
    %v64 = vpack.c.bf16 %v63, %v63
    %v65 = vld [vmem:[#allocation2] sm:$0xf]
    %v66 = vld [vmem:[#allocation2 + $0x4] sm:$0xf]
    %v67 = vld [vmem:[#allocation2 + $0x8] sm:$0xf]
    %v68 = vld [vmem:[#allocation2 + $0xc] sm:$0xf]
    %v69 = vld [vmem:[#allocation2 + $0x10] sm:$0xf]
    %v70 = vld [vmem:[#allocation2 + $0x14] sm:$0xf]
    %v71 = vld [vmem:[#allocation2 + $0x18] sm:$0xf]
    %v72 = vld [vmem:[#allocation2 + $0x1c] sm:$0xf]
    %v73 = vld [vmem:[#allocation2 + $0x20] sm:$0xf]
    %v74 = vld [vmem:[#allocation2 + $0x24] sm:$0xf]
    %v75 = vld [vmem:[#allocation2 + $0x28] sm:$0xf]
    %v76 = vld [vmem:[#allocation2 + $0x2c] sm:$0xf]
    %v77 = vld [vmem:[#allocation2 + $0x30] sm:$0xf]
    %v78 = vld [vmem:[#allocation2 + $0x34] sm:$0xf]
    %v79 = vld [vmem:[#allocation2 + $0x38] sm:$0xf]
    %v80 = vld [vmem:[#allocation2 + $0x3c] sm:$0xf]
    %v81 = vld [vmem:[%s4] sm:$0x1]
    %v82 = vlaneseq
    %v83 = vshrl.u32 %v82, 7
    %v84 = vsub.s32 0, %v83
    %v85 = vrot.slane %v81, %v84
    %v102 = vunpack.c.l.b16 %v65
    %v103 = vunpack.c.l.b16 %v66
    %v104 = vunpack.c.l.b16 %v67
    %v105 = vunpack.c.l.b16 %v68
    %v106 = vunpack.c.l.b16 %v69
    %v107 = vunpack.c.l.b16 %v70
    %v108 = vunpack.c.l.b16 %v71
    %v109 = vunpack.c.l.b16 %v72
    %v110 = vunpack.c.l.b16 %v73
    %v111 = vunpack.c.l.b16 %v74
    %v112 = vunpack.c.l.b16 %v75
    %v113 = vunpack.c.l.b16 %v76
    %v114 = vunpack.c.l.b16 %v77
    %v115 = vunpack.c.l.b16 %v78
    %v116 = vunpack.c.l.b16 %v79
    %v117 = vunpack.c.l.b16 %v80
    %v118 = vpack.c.b16 %v103, %v102
    %v119 = vpack.c.b16 %v105, %v104
    %v120 = vpack.c.b16 %v107, %v106
    %v121 = vpack.c.b16 %v109, %v108
    %v122 = vpack.c.b16 %v111, %v110
    %v123 = vpack.c.b16 %v113, %v112
    %v124 = vpack.c.b16 %v115, %v114
    %v125 = vpack.c.b16 %v117, %v116
    %134 = vmatprep.subr.bf16.mxu0 0
    %135 = vmatpush1.bf16.msra.mxu0 %v118
    %136 = vmatprep.subr.bf16.mxu0 0
    %137 = vmatpush1.bf16.msra.mxu0 %v119
    %138 = vmatprep.subr.bf16.mxu0 0
    %139 = vmatpush1.bf16.msra.mxu0 %v120
    %140 = vmatprep.subr.bf16.mxu0 0
    %141 = vmatpush1.bf16.msra.mxu0 %v121
    %142 = vmatprep.subr.bf16.mxu0 0
    %143 = vmatpush1.bf16.msra.mxu0 %v122
    %144 = vmatprep.subr.bf16.mxu0 0
    %145 = vmatpush1.bf16.msra.mxu0 %v123
    %146 = vmatprep.subr.bf16.mxu0 0
    %147 = vmatpush1.bf16.msra.mxu0 %v124
    %148 = vmatprep.subr.bf16.mxu0 0
    %149 = vmatpush1.bf16.msra.mxu0 %v125
    %150 = vmatprep.subr.bf16.mxu0 0
    %151 = vmatpush1.bf16.msra.mxu0 0
    %152 = vmatprep.subr.bf16.mxu0 0
    %153 = vmatpush1.bf16.msra.mxu0 0
    %154 = vmatprep.subr.bf16.mxu0 0
    %155 = vmatpush1.bf16.msra.mxu0 0
    %156 = vmatprep.subr.bf16.mxu0 0
    %157 = vmatpush1.bf16.msra.mxu0 0
    %158 = vmatprep.subr.bf16.mxu0 0
    %159 = vmatpush1.bf16.msra.mxu0 0
    %160 = vmatprep.subr.bf16.mxu0 0
    %161 = vmatpush1.bf16.msra.mxu0 0
    %162 = vmatprep.subr.bf16.mxu0 0
    %163 = vmatpush1.bf16.msra.mxu0 0
    %164 = vmatprep.subr.bf16.mxu0 0
    %165 = vmatpush1.bf16.msra.mxu0 0
    %166 = vmatprep.mubr.bf16.mxu0 0
    %167 = vmatmul.mubr.bf16.gmra.mrb[0].mxu0 %v64
    %v168 = vpop.f32.mrb[0].mxu0
    %v169 = vadd.f32 %v85, %v168
    %v170 = vpop.f32.mrb[0].mxu0
    %v171 = vpop.f32.mrb[0].mxu0
    %v172 = vpop.f32.mrb[0].mxu0
    %173 = vdwg.mxu0
    %v174 = vmax.f32 %v169, 0.0
    %v175 = vpack.c.bf16 %v174, %v174
    %v176 = vld [vmem:[#allocation5] sm:$0xf]
    %v177 = vld [vmem:[#allocation5 + $0x4] sm:$0xf]
    %v178 = vld [vmem:[#allocation5 + $0x8] sm:$0xf]
    %v179 = vld [vmem:[#allocation5 + $0xc] sm:$0xf]
    %v180 = vld [vmem:[#allocation5 + $0x10] sm:$0xf]
    %v181 = vld [vmem:[#allocation5 + $0x14] sm:$0xf]
    %v182 = vld [vmem:[#allocation5 + $0x18] sm:$0xf]
    %v183 = vld [vmem:[#allocation5 + $0x1c] sm:$0xf]
    %v184 = vld [vmem:[#allocation5 + $0x20] sm:$0xf]
    %v185 = vld [vmem:[#allocation5 + $0x24] sm:$0xf]
    %v186 = vld [vmem:[#allocation5 + $0x28] sm:$0xf]
    %v187 = vld [vmem:[#allocation5 + $0x2c] sm:$0xf]
    %v188 = vld [vmem:[#allocation5 + $0x30] sm:$0xf]
    %v189 = vld [vmem:[#allocation5 + $0x34] sm:$0xf]
    %v190 = vld [vmem:[#allocation5 + $0x38] sm:$0xf]
    %v191 = vld [vmem:[#allocation5 + $0x3c] sm:$0xf]
    %v192 = vld [vmem:[%s4 + $0x1] sm:$0x1]
    %v193 = vlaneseq
    %v194 = vshrl.u32 %v193, 7
    %v195 = vsub.s32 0, %v194
    %v196 = vrot.slane %v192, %v195
    %v213 = vunpack.c.l.b16 %v176
    %v214 = vunpack.c.l.b16 %v177
    %v215 = vunpack.c.l.b16 %v178
    %v216 = vunpack.c.l.b16 %v179
    %v217 = vunpack.c.l.b16 %v180
    %v218 = vunpack.c.l.b16 %v181
    %v219 = vunpack.c.l.b16 %v182
    %v220 = vunpack.c.l.b16 %v183
    %v221 = vunpack.c.l.b16 %v184
    %v222 = vunpack.c.l.b16 %v185
    %v223 = vunpack.c.l.b16 %v186
    %v224 = vunpack.c.l.b16 %v187
    %v225 = vunpack.c.l.b16 %v188
    %v226 = vunpack.c.l.b16 %v189
    %v227 = vunpack.c.l.b16 %v190
    %v228 = vunpack.c.l.b16 %v191
    %v229 = vpack.c.b16 %v214, %v213
    %v230 = vpack.c.b16 %v216, %v215
    %v231 = vpack.c.b16 %v218, %v217
    %v232 = vpack.c.b16 %v220, %v219
    %v233 = vpack.c.b16 %v222, %v221
    %v234 = vpack.c.b16 %v224, %v223
    %v235 = vpack.c.b16 %v226, %v225
    %v236 = vpack.c.b16 %v228, %v227
    %245 = vmatprep.subr.bf16.mxu0 0
    %246 = vmatpush1.bf16.msra.mxu0 %v229
    %247 = vmatprep.subr.bf16.mxu0 0
    %248 = vmatpush1.bf16.msra.mxu0 %v230
    %249 = vmatprep.subr.bf16.mxu0 0
    %250 = vmatpush1.bf16.msra.mxu0 %v231
    %251 = vmatprep.subr.bf16.mxu0 0
    %252 = vmatpush1.bf16.msra.mxu0 %v232
    %253 = vmatprep.subr.bf16.mxu0 0
    %254 = vmatpush1.bf16.msra.mxu0 %v233
    %255 = vmatprep.subr.bf16.mxu0 0
    %256 = vmatpush1.bf16.msra.mxu0 %v234
    %257 = vmatprep.subr.bf16.mxu0 0
    %258 = vmatpush1.bf16.msra.mxu0 %v235
    %259 = vmatprep.subr.bf16.mxu0 0
    %260 = vmatpush1.bf16.msra.mxu0 %v236
    %261 = vmatprep.subr.bf16.mxu0 0
    %262 = vmatpush1.bf16.msra.mxu0 0
    %263 = vmatprep.subr.bf16.mxu0 0
    %264 = vmatpush1.bf16.msra.mxu0 0
    %265 = vmatprep.subr.bf16.mxu0 0
    %266 = vmatpush1.bf16.msra.mxu0 0
    %267 = vmatprep.subr.bf16.mxu0 0
    %268 = vmatpush1.bf16.msra.mxu0 0
    %269 = vmatprep.subr.bf16.mxu0 0
    %270 = vmatpush1.bf16.msra.mxu0 0
    %271 = vmatprep.subr.bf16.mxu0 0
    %272 = vmatpush1.bf16.msra.mxu0 0
    %273 = vmatprep.subr.bf16.mxu0 0
    %274 = vmatpush1.bf16.msra.mxu0 0
    %275 = vmatprep.subr.bf16.mxu0 0
    %276 = vmatpush1.bf16.msra.mxu0 0
    %277 = vmatprep.mubr.bf16.mxu0 0
    %278 = vmatmul.mubr.bf16.gmra.mrb[0].mxu0 %v175
    %v279 = vpop.f32.mrb[0].mxu0
    %v280 = vadd.f32 %v196, %v279
    %v281 = vpop.f32.mrb[0].mxu0
    %v282 = vpop.f32.mrb[0].mxu0
    %v283 = vpop.f32.mrb[0].mxu0
    %284 = vdwg.mxu0
    %v285 = vmax.f32 %v280, 0.0
    %v286 = vpack.c.bf16 %v285, %v285
    %v287 = vld [vmem:[#allocation7] sm:$0xf]
    %v288 = vld [vmem:[#allocation7 + $0x4] sm:$0xf]
    %v289 = vld [vmem:[#allocation7 + $0x8] sm:$0xf]
    %v290 = vld [vmem:[#allocation7 + $0xc] sm:$0xf]
    %v291 = vld [vmem:[#allocation7 + $0x10] sm:$0xf]
    %v292 = vld [vmem:[#allocation7 + $0x14] sm:$0xf]
    %v293 = vld [vmem:[#allocation7 + $0x18] sm:$0xf]
    %v294 = vld [vmem:[#allocation7 + $0x1c] sm:$0xf]
    %v295 = vld [vmem:[#allocation7 + $0x20] sm:$0xf]
    %v296 = vld [vmem:[#allocation7 + $0x24] sm:$0xf]
    %v297 = vld [vmem:[#allocation7 + $0x28] sm:$0xf]
    %v298 = vld [vmem:[#allocation7 + $0x2c] sm:$0xf]
    %v299 = vld [vmem:[#allocation7 + $0x30] sm:$0xf]
    %v300 = vld [vmem:[#allocation7 + $0x34] sm:$0xf]
    %v301 = vld [vmem:[#allocation7 + $0x38] sm:$0xf]
    %v302 = vld [vmem:[#allocation7 + $0x3c] sm:$0xf]
    %v303 = vld [vmem:[%s4 + $0x2] sm:$0x1]
    %v304 = vlaneseq
    %v305 = vshrl.u32 %v304, 7
    %v306 = vsub.s32 0, %v305
    %v307 = vrot.slane %v303, %v306
    %v324 = vunpack.c.l.b16 %v287
    %v325 = vunpack.c.l.b16 %v288
    %v326 = vunpack.c.l.b16 %v289
    %v327 = vunpack.c.l.b16 %v290
    %v328 = vunpack.c.l.b16 %v291
    %v329 = vunpack.c.l.b16 %v292
    %v330 = vunpack.c.l.b16 %v293
    %v331 = vunpack.c.l.b16 %v294
    %v332 = vunpack.c.l.b16 %v295
    %v333 = vunpack.c.l.b16 %v296
    %v334 = vunpack.c.l.b16 %v297
    %v335 = vunpack.c.l.b16 %v298
    %v336 = vunpack.c.l.b16 %v299
    %v337 = vunpack.c.l.b16 %v300
    %v338 = vunpack.c.l.b16 %v301
    %v339 = vunpack.c.l.b16 %v302
    %v340 = vpack.c.b16 %v325, %v324
    %v341 = vpack.c.b16 %v327, %v326
    %v342 = vpack.c.b16 %v329, %v328
    %v343 = vpack.c.b16 %v331, %v330
    %v344 = vpack.c.b16 %v333, %v332
    %v345 = vpack.c.b16 %v335, %v334
    %v346 = vpack.c.b16 %v337, %v336
    %v347 = vpack.c.b16 %v339, %v338
    %356 = vmatprep.subr.bf16.mxu0 0
    %357 = vmatpush1.bf16.msra.mxu0 %v340
    %358 = vmatprep.subr.bf16.mxu0 0
    %359 = vmatpush1.bf16.msra.mxu0 %v341
    %360 = vmatprep.subr.bf16.mxu0 0
    %361 = vmatpush1.bf16.msra.mxu0 %v342
    %362 = vmatprep.subr.bf16.mxu0 0
    %363 = vmatpush1.bf16.msra.mxu0 %v343
    %364 = vmatprep.subr.bf16.mxu0 0
    %365 = vmatpush1.bf16.msra.mxu0 %v344
    %366 = vmatprep.subr.bf16.mxu0 0
    %367 = vmatpush1.bf16.msra.mxu0 %v345
    %368 = vmatprep.subr.bf16.mxu0 0
    %369 = vmatpush1.bf16.msra.mxu0 %v346
    %370 = vmatprep.subr.bf16.mxu0 0
    %371 = vmatpush1.bf16.msra.mxu0 %v347
    %372 = vmatprep.subr.bf16.mxu0 0
    %373 = vmatpush1.bf16.msra.mxu0 0
    %374 = vmatprep.subr.bf16.mxu0 0
    %375 = vmatpush1.bf16.msra.mxu0 0
    %376 = vmatprep.subr.bf16.mxu0 0
    %377 = vmatpush1.bf16.msra.mxu0 0
    %378 = vmatprep.subr.bf16.mxu0 0
    %379 = vmatpush1.bf16.msra.mxu0 0
    %380 = vmatprep.subr.bf16.mxu0 0
    %381 = vmatpush1.bf16.msra.mxu0 0
    %382 = vmatprep.subr.bf16.mxu0 0
    %383 = vmatpush1.bf16.msra.mxu0 0
    %384 = vmatprep.subr.bf16.mxu0 0
    %385 = vmatpush1.bf16.msra.mxu0 0
    %386 = vmatprep.subr.bf16.mxu0 0
    %387 = vmatpush1.bf16.msra.mxu0 0
    %388 = vmatprep.mubr.bf16.mxu0 0
    %389 = vmatmul.mubr.bf16.gmra.mrb[0].mxu0 %v286
    %v390 = vpop.f32.mrb[0].mxu0
    %v391 = vadd.f32 %v307, %v390
    %v392 = vpop.f32.mrb[0].mxu0
    %v393 = vpop.f32.mrb[0].mxu0
    %v394 = vpop.f32.mrb[0].mxu0
    %395 = vdwg.mxu0
    %v396 = vtanh.pop %v391
    %397 = vst [vmem:[#allocation8] sm:$0xff] %v396
    // Predicated region
    $region34: #{actor_forward.1} parent=1 // pred_check
      _
    $region35: #{actor_forward.1} parent=1 // pred_check_branch
      %399 = sbr.rel (0) target = $region37
    $region36: #{actor_forward.1} parent=1 // pred_region
      %s401 = ssub.s32 128, 128
      %402 = vsyncadd [#allocation4], %s401
      %s404 = sshll.u32 [#allocation8], 4
      %s405 = int_to_ptr.vmem [resolvable:$true] %s404
      %407 = dma.vmem_to_hbm [thread:$0]  %s405, 128, %s5, [#allocation4]
    $region37: #{actor_forward.1} parent=1 // pred_fallthru
      _
    // Predicated region
    $region38: #{actor_forward.1} parent=1 // pred_check
      _
    $region39: #{actor_forward.1} parent=1 // pred_check_branch
      %409 = sbr.rel (0) target = $region41
    $region40: #{actor_forward.1} parent=1 // pred_region
      %410 = dma.done [#allocation4], 128
    $region41: #{actor_forward.1} parent=1 // pred_fallthru
      _
    %411 = vsyncpa [#allocation3], 1
    %412 = vsyncpa [#allocation6], 1
    %413 = vsyncpa [#allocation4], 1

</llo_original>
